<compile_context>
chip_gen: v7x
topology: tpu7x:2x2x1
jax: 0.10.0
libtpu: 0.0.40
codegen_flags: <defaults>
</compile_context>

<pallas_src>
import math

import jax
import jax.numpy as jnp
from jax.experimental import pallas as pl
from jax.experimental.pallas import tpu as pltpu


OUT_PAD = 128                          # lane-dense output width
VMEM_LIMIT_BYTES = 48 * 1024 * 1024    # explicit scoped VMEM (fits v7x's 64 MiB)


def _round_up(x, m):
    return (x + m - 1) // m * m


# ---------------------------------------------------------------------------
# Kernels
# ---------------------------------------------------------------------------
def _project_kernel(h_ref, w_ref, o_ref):
    """Per-row-tile feature projection: O = H @ W  (bf16 in, bf16 out)."""
    o_ref[...] = jnp.dot(
        h_ref[...], w_ref[...], preferred_element_type=jnp.float32
    ).astype(o_ref.dtype)


def _aggregate_kernel(adj_ref, p_ref, b_ref, o_ref, acc_ref):
    """One GCN aggregation: O = relu(Â @ P + b), tiled over (row, k)."""
    k = pl.program_id(1)

    @pl.when(k == 0)
    def _init():
        acc_ref[...] = jnp.zeros_like(acc_ref)

    acc_ref[...] += jnp.dot(
        adj_ref[...], p_ref[...], preferred_element_type=jnp.float32
    )

    @pl.when(k == pl.num_programs(1) - 1)
    def _finalize():
        # bias + relu in f32; F.dropout(training=False) is identity.
        o_ref[...] = jnp.maximum(acc_ref[...] + b_ref[...], 0.0).astype(o_ref.dtype)


def _aggregate_dense_tail_kernel(adj_ref, p_ref, b_ref,
                                 wd1_ref, bd1_ref, wd2_ref, bd2_ref,
                                 out_ref, acc_ref):
    """Last GCN aggregation with dense1+relu+dense_out fused into the epilogue."""
    k = pl.program_id(1)

    @pl.when(k == 0)
    def _init():
        acc_ref[...] = jnp.zeros_like(acc_ref)

    acc_ref[...] += jnp.dot(
        adj_ref[...], p_ref[...], preferred_element_type=jnp.float32
    )

    @pl.when(k == pl.num_programs(1) - 1)
    def _finalize():
        h = jnp.maximum(acc_ref[...] + b_ref[...], 0.0)              # [TM, H1] f32
        h = h.astype(jnp.bfloat16)
        h = jnp.dot(h, wd1_ref[...],
                    preferred_element_type=jnp.float32) + bd1_ref[...]
        h = jnp.maximum(h, 0.0).astype(jnp.bfloat16)                 # dense1 + relu
        out_ref[...] = (jnp.dot(h, wd2_ref[...],
                                preferred_element_type=jnp.float32)
                        + bd2_ref[...]).astype(out_ref.dtype)        # dense_out (padded)


# ---------------------------------------------------------------------------
# pallas_call wrappers
# ---------------------------------------------------------------------------
def _project(h, w, *, tm):
    n_pad, f_in = h.shape
    f_out = w.shape[1]
    return pl.pallas_call(
        _project_kernel,
        out_shape=jax.ShapeDtypeStruct((n_pad, f_out), jnp.bfloat16),
        grid=(n_pad // tm,),
        in_specs=[
            pl.BlockSpec((tm, f_in), lambda i: (i, 0)),
            pl.BlockSpec((f_in, f_out), lambda i: (0, 0)),
        ],
        out_specs=pl.BlockSpec((tm, f_out), lambda i: (i, 0)),
        compiler_params=pltpu.CompilerParams(
            dimension_semantics=("parallel",),
            vmem_limit_bytes=VMEM_LIMIT_BYTES,
        ),
    )(h, w)


def _aggregate(adj, p, b, *, tm, tk):
    n_pad = adj.shape[0]
    h_dim = p.shape[1]
    return pl.pallas_call(
        _aggregate_kernel,
        out_shape=jax.ShapeDtypeStruct((n_pad, h_dim), jnp.bfloat16),
        grid=(n_pad // tm, n_pad // tk),
        in_specs=[
            pl.BlockSpec((tm, tk), lambda i, k: (i, k)),     # Â tile
            pl.BlockSpec((tk, h_dim), lambda i, k: (k, 0)),  # projected features
            pl.BlockSpec((1, h_dim), lambda i, k: (0, 0)),   # bias (resident)
        ],
        out_specs=pl.BlockSpec((tm, h_dim), lambda i, k: (i, 0)),
        scratch_shapes=[pltpu.VMEM((tm, h_dim), jnp.float32)],
        compiler_params=pltpu.CompilerParams(
            dimension_semantics=("parallel", "arbitrary"),
            vmem_limit_bytes=VMEM_LIMIT_BYTES,
        ),
    )(adj, p, b)


def _aggregate_dense_tail(adj, p, b, wd1, bd1, wd2p, bd2p, *, tm, tk):
    n_pad = adj.shape[0]
    h_dim = p.shape[1]
    hd = wd1.shape[1]
    return pl.pallas_call(
        _aggregate_dense_tail_kernel,
        out_shape=jax.ShapeDtypeStruct((n_pad, OUT_PAD), jnp.float32),
        grid=(n_pad // tm, n_pad // tk),
        in_specs=[
            pl.BlockSpec((tm, tk), lambda i, k: (i, k)),      # Â tile
            pl.BlockSpec((tk, h_dim), lambda i, k: (k, 0)),   # projected features
            pl.BlockSpec((1, h_dim), lambda i, k: (0, 0)),    # GCN bias
            pl.BlockSpec((h_dim, hd), lambda i, k: (0, 0)),   # dense1 weight
            pl.BlockSpec((1, hd), lambda i, k: (0, 0)),       # dense1 bias
            pl.BlockSpec((hd, OUT_PAD), lambda i, k: (0, 0)), # dense_out weight (padded)
            pl.BlockSpec((1, OUT_PAD), lambda i, k: (0, 0)),  # dense_out bias (padded)
        ],
        out_specs=pl.BlockSpec((tm, OUT_PAD), lambda i, k: (i, 0)),
        scratch_shapes=[pltpu.VMEM((tm, h_dim), jnp.float32)],
        compiler_params=pltpu.CompilerParams(
            dimension_semantics=("parallel", "arbitrary"),
            vmem_limit_bytes=VMEM_LIMIT_BYTES,
        ),
    )(adj, p, b, wd1, bd1, wd2p, bd2p)


def gnn_forward_pallas(adj, x, params, *, tm=256, tk=512):
    """Fused GNN forward pass (2 GCN layers + dense1 + dense_out), tiled.

    adj:    [N, N] normalized dense adjacency (float32)
    x:      [N, C_in] node features (float32)
    params: dict of weights [in, out] and biases [1, out] (float32)
    tm/tk:  row / reduction tile sizes (multiples of 128); clamped to N.
    """
    n = x.shape[0]
    f_in = x.shape[1]
    out_ch = params["wd2"].shape[1]
    hd = params["wd1"].shape[1]

    # Clamp tiles for small graphs, pad N so both tm and tk divide it.
    tm = min(tm, _round_up(n, 128))
    tk = min(tk, _round_up(n, 128))
    n_pad = _round_up(n, math.lcm(tm, tk))

    bf = jnp.bfloat16
    # Pad + cast once in the wrapper (not per grid step).  Padded rows/cols of
    # Â are zero, so they never contribute to real output rows.
    adj_p = jnp.zeros((n_pad, n_pad), bf).at[:n, :n].set(adj.astype(bf))
    x_p = jnp.zeros((n_pad, f_in), bf).at[:n, :].set(x.astype(bf))

    w0 = params["w0"].astype(bf)
    w1 = params["w1"].astype(bf)
    wd1 = params["wd1"].astype(bf)
    b0 = params["b0"].astype(jnp.float32)
    b1 = params["b1"].astype(jnp.float32)
    bd1 = params["bd1"].astype(jnp.float32)
    # Lane-dense output: zero-pad dense_out to 128 columns, slice afterwards.
    wd2p = (jnp.zeros((hd, OUT_PAD), jnp.float32)
            .at[:, :out_ch].set(params["wd2"])).astype(bf)
    bd2p = jnp.zeros((1, OUT_PAD), jnp.float32).at[:, :out_ch].set(params["bd2"])

    # --- GCN layer 0: project, then tiled aggregation ---------------------
    p0 = _project(x_p, w0, tm=tm)
    h1 = _aggregate(adj_p, p0, b0, tm=tm, tk=tk)
    # --- GCN layer 1 + fused dense tail ------------------------------------
    p1 = _project(h1, w1, tm=tm)
    out_p = _aggregate_dense_tail(adj_p, p1, b1, wd1, bd1, wd2p, bd2p,
                                  tm=tm, tk=tk)
    return out_p[:n, :out_ch]


# ---------------------------------------------------------------------------
# Glue + references (plain JAX)
# ---------------------------------------------------------------------------
def gcn_normalized_adjacency(edge_index, num_nodes):
    """Dense Â = D^{-1/2}(A + I)D^{-1/2} from an edge list."""
    src = edge_index[0]
    dst = edge_index[1]
    a = jnp.zeros((num_nodes, num_nodes), jnp.float32)
    a = a.at[dst, src].set(1.0)                       # message flows src -> dst
    a = a + jnp.eye(num_nodes, dtype=jnp.float32)     # add self loops
    deg = jnp.sum(a, axis=1)
    d_inv_sqrt = 1.0 / jnp.sqrt(jnp.maximum(deg, 1e-12))
    return d_inv_sqrt[:, None] * a * d_inv_sqrt[None, :]


def init_params(key, in_channels, hidden_channels, hidden_dense, out_channels):
    keys = jax.random.split(key, 8)

    def dense(kw, kb, fan_in, fan_out):
        scale = 1.0 / jnp.sqrt(jnp.float32(fan_in))
        w = jax.random.normal(kw, (fan_in, fan_out), jnp.float32) * scale
        b = jax.random.normal(kb, (1, fan_out), jnp.float32) * scale
        return w, b

    w0, b0 = dense(keys[0], keys[1], in_channels, hidden_channels[0])
    w1, b1 = dense(keys[2], keys[3], hidden_channels[0], hidden_channels[1])
    wd1, bd1 = dense(keys[4], keys[5], hidden_channels[1], hidden_dense)
    wd2, bd2 = dense(keys[6], keys[7], hidden_dense, out_channels)
    return dict(w0=w0, b0=b0, w1=w1, b1=b1,
                wd1=wd1, bd1=bd1, wd2=wd2, bd2=bd2)


def gnn_forward_ref(adj, x, p):
    """Pure-f32 reference (original module semantics, eval mode)."""
    h = jnp.maximum(adj @ (x @ p["w0"]) + p["b0"], 0.0)
    h = jnp.maximum(adj @ (h @ p["w1"]) + p["b1"], 0.0)
    h = jnp.maximum(h @ p["wd1"] + p["bd1"], 0.0)
    return h @ p["wd2"] + p["bd2"]


def gnn_forward_ref_bf16(adj, x, p):
    """Reference mirroring the kernel's bf16-operand / f32-accumulate dtype flow."""
    bf, f32 = jnp.bfloat16, jnp.float32
    f = lambda a: a.astype(bf).astype(f32)
    p0 = (f(x) @ f(p["w0"])).astype(bf).astype(f32)
    h1 = jnp.maximum(f(adj) @ p0 + p["b0"], 0.0).astype(bf).astype(f32)
    p1 = (h1 @ f(p["w1"])).astype(bf).astype(f32)
    h2 = jnp.maximum(f(adj) @ p1 + p["b1"], 0.0).astype(bf).astype(f32)
    h3 = jnp.maximum(h2 @ f(p["wd1"]) + p["bd1"], 0.0).astype(bf).astype(f32)
    return h3 @ f(p["wd2"]) + p["bd2"]


if __name__ == "__main__":
    # Small but non-trivial config consistent with the module:
    # in=16, hidden=[32, 32], hidden_dense=32, out=4, N=256 nodes
    # (tm=tk=128 -> 2x2 grid, exercising the accumulator/when path).
    N = 256
    IN_CH = 16
    HIDDEN = [32, 32]
    HIDDEN_DENSE = 32
    OUT_CH = 4

    key = jax.random.PRNGKey(0)
    k_x, k_p = jax.random.split(key)

    x = jax.random.normal(k_x, (N, IN_CH), jnp.float32)

    # Deterministic graph: bidirectional ring + "+7" skip connections.
    idx = jnp.arange(N)
    nxt = (idx + 1) % N
    skp = (idx + 7) % N
    edge_index = jnp.stack(
        [jnp.concatenate([idx, nxt, idx, skp]),
         jnp.concatenate([nxt, idx, skp, idx])], axis=0)

    adj = gcn_normalized_adjacency(edge_index, N)
    params = init_params(k_p, IN_CH, HIDDEN, HIDDEN_DENSE, OUT_CH)

    out = gnn_forward_pallas(adj, x, params, tm=128, tk=128)
    out = jax.block_until_ready(out)

    assert out.shape == (N, OUT_CH)
    ref_bf = gnn_forward_ref_bf16(adj, x, params)   # matches kernel dtype flow
    ref_f32 = gnn_forward_ref(adj, x, params)       # original f32 semantics
    assert jnp.allclose(out, ref_bf, atol=1e-2, rtol=1e-2), "mismatch vs bf16 reference"
    assert jnp.allclose(out, ref_f32, atol=5e-2, rtol=5e-2), "mismatch vs f32 reference"

    print("KERNEL_OK")
</pallas_src>

<mosaic_0001>
module attributes {stable_mosaic.version = 11 : i64} {
  func.func @_project_kernel(%arg0: i32, %arg1: memref<128x16xbf16, #tpu.memory_space<vmem>>, %arg2: memref<16x32xbf16, #tpu.memory_space<vmem>>, %arg3: memref<128x32xbf16, #tpu.memory_space<vmem>>) attributes {dimension_semantics = [#tpu.dimension_semantics<parallel>], iteration_bounds = array<i64: 2>, scalar_prefetch = 0 : i64, scratch_operands = 0 : i64, tpu.core_type = #tpu.core_type<tc>, window_params = [{transform_indices = @transform_0, window_bounds = array<i64: 128, 16>}, {pipeline_mode = #tpu.pipeline_mode<synchronous>, transform_indices = @transform_1, window_bounds = array<i64: 16, 32>}, {transform_indices = @transform_2, window_bounds = array<i64: 128, 32>}]} {
    %c0 = arith.constant 0 : index
    %c0_0 = arith.constant 0 : index
    %0 = vector.load %arg1[%c0, %c0_0] : memref<128x16xbf16, #tpu.memory_space<vmem>>, vector<128x16xbf16>
    %c0_1 = arith.constant 0 : index
    %c0_2 = arith.constant 0 : index
    %1 = vector.load %arg2[%c0_1, %c0_2] : memref<16x32xbf16, #tpu.memory_space<vmem>>, vector<16x32xbf16>
    %cst = arith.constant dense<0.000000e+00> : vector<128x32xf32>
    %2 = tpu.matmul %0, %1, %cst {dimension_numbers = #tpu.dot_dimension_numbers<[1], [0], [0], [1], [0, 0, 1, 1], [], []>} : vector<128x16xbf16>, vector<16x32xbf16>, vector<128x32xf32> -> vector<128x32xf32>
    %3 = arith.truncf %2 : vector<128x32xf32> to vector<128x32xbf16>
    %c0_3 = arith.constant 0 : index
    %c0_4 = arith.constant 0 : index
    %4 = vector.load %arg3[%c0_3, %c0_4] : memref<128x32xbf16, #tpu.memory_space<vmem>>, vector<128x32xbf16>
    tpu.vector_store %arg3[%c0_3, %c0_4], %3 {strides = array<i32>} : memref<128x32xbf16, #tpu.memory_space<vmem>>, vector<128x32xbf16>,
    return
  }
  func.func @transform_0(%arg0: i32) -> (i32, i32) {
    %c0_i32 = arith.constant 0 : i32
    %c0_i32_0 = arith.constant 0 : i32
    return %arg0, %c0_i32 : i32, i32
  }
  func.func @transform_1(%arg0: i32) -> (i32, i32) {
    %c0_i32 = arith.constant 0 : i32
    %c0_i32_0 = arith.constant 0 : i32
    %c0_i32_1 = arith.constant 0 : i32
    return %c0_i32, %c0_i32_0 : i32, i32
  }
  func.func @transform_2(%arg0: i32) -> (i32, i32) {
    %c0_i32 = arith.constant 0 : i32
    %c0_i32_0 = arith.constant 0 : i32
    return %arg0, %c0_i32 : i32, i32
  }
}

</mosaic_0001>

<llo_original>
// kernel: tpu_custom_call.1
$region0: #{tpu_custom_call.1}
  #allocation0 [shape = 'u32[]', space=smem, size = 0x4, offset = 0x4, fixed_abs, tag = 'smem constant byte address 0x4 - core index']
  #allocation1 [shape = 'u32[144,128]{1,0:T(1,128)}', space=vmem, size = 0x12000, scoped, tag = 'internal scratch']
  %s0 = inlined_call_operand.vmem [shape: bf16[256,16], index: 0, kind: input, shape index: {}]
  %s1 = inlined_call_operand.vmem [shape: bf16[16,32], index: 1, kind: input, shape index: {}]
  %s2 = inlined_call_operand.vmem [shape: bf16[256,32], index: 2, kind: output, shape index: {}]
  %s3 = sld [smem:[#allocation0]]
  $region41: #{tpu_custom_call.1} parent=0
    _
  %s5 = ssub.s32 1, %s3
  %s6 = scalar_select 0, %s5, %s3
  loop: start=0, step=1, limit=4
  $region2: #{tpu_custom_call.1} parent=0 // loop_pre_header
    _
  $region3: #{tpu_custom_call.1} parent=0 // loop_header
    %s8 = sphi 0, %s12
    %p9 = scmp.ge.s32.totalorder %s8, 4
    %s18 = sphi 0, %s20
    %s21 = sphi 0, %s18
    %s22 = sphi 0, %s21
    %s38 = sphi 0, %s22
    %s42 = sphi 0, %s42
    %s44 = sphi 0, %s42
    %s45 = sphi 0, %s44
    %s59 = sphi 0, %s45
    %s65 = sphi 0, %s67
    %s68 = sphi 0, %s65
    %s69 = sphi 0, %s68
    %s85 = sphi 0, %s69
  $region4: #{tpu_custom_call.1} parent=0 // loop_header_branch
    %11 = sbr.rel (%p9) target = $region8
  $region5: #{tpu_custom_call.1} parent=0 // loop_body
    %s13 = ssub.s32 %s8, 1
    %s14 = ssub.s32 %s8, 2
    %s15 = sadd.s32 %s8, 1
    %s16 = ssub.s32 %s8, %s15
    %p17 = scmp.eq.s32.totalorder %s16, 0
    %s19 = sadd.s32 %s18, 1
    %s20 = scalar_select %p17, %s18, %s19
    %p23 = pneg %p17
    %p24 = scmp.eq.s32.totalorder %s8, 1
    %p25 = por %p23, %p24
    %p26 = scmp.ne.s32.totalorder %s18, %s21
    %p27 = scmp.eq.s32.totalorder %s8, 0
    %p28 = por %p26, %p27
    %p29 = scmp.ne.s32.totalorder %s18, %s21
    %p30 = scmp.eq.s32.totalorder %s13, 1
    %p31 = por %p29, %p30
    %p32 = scmp.ne.s32.totalorder %s21, %s22
    %p33 = scmp.eq.s32.totalorder %s13, 0
    %p34 = por %p32, %p33
    %p35 = scmp.ne.s32.totalorder %s21, %s22
    %p36 = scmp.eq.s32.totalorder %s14, 1
    %p37 = por %p35, %p36
    %p39 = scmp.ne.s32.totalorder %s22, %s38
    %p40 = scmp.eq.s32.totalorder %s14, 0
    %p41 = por %p39, %p40
    %s43 = sadd.s32 %s42, 1
    %p46 = scmp.eq.s32.totalorder %s8, 1
    %p47 = scmp.ne.s32.totalorder %s42, %s44
    %p48 = scmp.eq.s32.totalorder %s8, 0
    %p49 = por %p47, %p48
    %p50 = scmp.ne.s32.totalorder %s42, %s44
    %p51 = scmp.eq.s32.totalorder %s13, 1
    %p52 = por %p50, %p51
    %p53 = scmp.ne.s32.totalorder %s44, %s45
    %p54 = scmp.eq.s32.totalorder %s13, 0
    %p55 = por %p53, %p54
    %p56 = scmp.ne.s32.totalorder %s44, %s45
    %p57 = scmp.eq.s32.totalorder %s14, 1
    %p58 = por %p56, %p57
    %p60 = scmp.ne.s32.totalorder %s45, %s59
    %p61 = scmp.eq.s32.totalorder %s14, 0
    %p62 = por %p60, %p61
    %s63 = ssub.s32 %s8, %s15
    %p64 = scmp.eq.s32.totalorder %s63, 0
    %s66 = sadd.s32 %s65, 1
    %s67 = scalar_select %p64, %s65, %s66
    %p70 = pneg %p64
    %p71 = scmp.eq.s32.totalorder %s8, 1
    %p72 = por %p70, %p71
    %p73 = scmp.ne.s32.totalorder %s65, %s68
    %p74 = scmp.eq.s32.totalorder %s8, 0
    %p75 = por %p73, %p74
    %p76 = scmp.ne.s32.totalorder %s65, %s68
    %p77 = scmp.eq.s32.totalorder %s13, 1
    %p78 = por %p76, %p77
    %p79 = scmp.ne.s32.totalorder %s68, %s69
    %p80 = scmp.eq.s32.totalorder %s13, 0
    %p81 = por %p79, %p80
    %p82 = scmp.ne.s32.totalorder %s68, %s69
    %p83 = scmp.eq.s32.totalorder %s14, 1
    %p84 = por %p82, %p83
    %p86 = scmp.ne.s32.totalorder %s69, %s85
    %p87 = scmp.eq.s32.totalorder %s14, 0
    %p88 = por %p86, %p87
    %p89 = scmp.le.s32.totalorder 1, %s8
    %p90 = scmp.lt.s32.totalorder %s8, 3
    %p91 = pnand %p89, %p90
    %p92 = pneg %p91
    // Predicated region
    $region9: #{tpu_custom_call.1} parent=5 // pred_check
      _
    $region10: #{tpu_custom_call.1} parent=5 // pred_check_branch
      %94 = sbr.rel (%p91) target = $region12
    $region11: #{tpu_custom_call.1} parent=5 // pred_region
      %s95 = ssub.s32 %s8, 1
      // Predicated region
      $region13: #{tpu_custom_call.1} parent=11 // pred_check
        %p96 = pneg %p55
      $region14: #{tpu_custom_call.1} parent=11 // pred_check_branch
        %98 = sbr.rel (%p96) target = $region16
      $region15: #{tpu_custom_call.1} parent=11 // pred_region
        _
      $region16: #{tpu_custom_call.1} parent=11 // pred_fallthru
        _
    $region12: #{tpu_custom_call.1} parent=5 // pred_fallthru
      _
    %p99 = scmp.lt.s32.totalorder %s8, 2
    // Predicated region
    $region17: #{tpu_custom_call.1} parent=5 // pred_check
      %p100 = pneg %p99
    $region18: #{tpu_custom_call.1} parent=5 // pred_check_branch
      %102 = sbr.rel (%p100) target = $region20
    $region19: #{tpu_custom_call.1} parent=5 // pred_region
      // Predicated region
      $region21: #{tpu_custom_call.1} parent=19 // pred_check
        %p103 = pneg %p28
      $region22: #{tpu_custom_call.1} parent=19 // pred_check_branch
        %105 = sbr.rel (%p103) target = $region24
      $region23: #{tpu_custom_call.1} parent=19 // pred_region
        %s106 = smul.u32 16, %s8
        %p107 = scmp.lt.s32.totalorder %s106, 31
        %s108 = scalar_select %p107, %s106, 31
        %s109 = smul.addr %s108, 4
        %s110 = scalar_lea.vmem %s0, %s109
        %s111 = smul.u32 16, %s8
      $region24: #{tpu_custom_call.1} parent=19 // pred_fallthru
        _
    $region20: #{tpu_custom_call.1} parent=5 // pred_fallthru
      _
    %p112 = scmp.le.s32.totalorder 1, %s8
    %p113 = scmp.lt.s32.totalorder %s8, 3
    %p114 = pnand %p112, %p113
    %p115 = pneg %p114
    // Predicated region
    $region25: #{tpu_custom_call.1} parent=5 // pred_check
      _
    $region26: #{tpu_custom_call.1} parent=5 // pred_check_branch
      %117 = sbr.rel (%p114) target = $region28
    $region27: #{tpu_custom_call.1} parent=5 // pred_region
      %s118 = ssub.s32 %s8, 1
      %s119 = smul.u32 16, %s13
      %p120 = scmp.lt.s32.totalorder %s119, 31
      %s121 = scalar_select %p120, %s119, 31
      %s122 = smul.addr %s121, 4
      %s123 = scalar_lea.vmem %s0, %s122
      %p124 = pneg %p34
      %p125 = pneg %p31
      %p126 = pneg %p55
      %p127 = pneg %p52
      %p128 = pneg %p81
      %p129 = pneg %p78
      %s130 = smul.u32 16, %s13
      %p131 = scmp.lt.s32.totalorder %s130, 31
      %s132 = scalar_select %p131, %s130, 31
      %s133 = smul.addr %s132, 4
      %s134 = scalar_lea.vmem %s2, %s133
      %s135 = smul.u32 16, %s13
      %p136 = scmp.lt.s32.totalorder %s135, 31
      %s137 = scalar_select %p136, %s135, 31
      %s138 = smul.addr %s137, 4
      %s139 = scalar_lea.vmem %s0, %s138
      %s140 = smul.u32 16, %s13
      %s141 = smul.u32 16, %s13
      %p142 = scmp.lt.s32.totalorder %s141, 31
      %s143 = scalar_select %p142, %s141, 31
      %s144 = smul.addr %s143, 4
      %s145 = scalar_lea.vmem %s2, %s144
      %s146 = smul.u32 16, %s13
      %v148 = vld [vmem:[%s139] sm:$0xf]
      %v149 = vld [vmem:[%s139 + $0x4] sm:$0xf]
      %v150 = vld [vmem:[%s139 + $0x8] sm:$0xf]
      %v151 = vld [vmem:[%s139 + $0xc] sm:$0xf]
      %v152 = vld [vmem:[%s139 + $0x10] sm:$0xf]
      %v153 = vld [vmem:[%s139 + $0x14] sm:$0xf]
      %v154 = vld [vmem:[%s139 + $0x18] sm:$0xf]
      %v155 = vld [vmem:[%s139 + $0x1c] sm:$0xf]
      %v156 = vld [vmem:[%s139 + $0x20] sm:$0xf]
      %v157 = vld [vmem:[%s139 + $0x24] sm:$0xf]
      %v158 = vld [vmem:[%s139 + $0x28] sm:$0xf]
      %v159 = vld [vmem:[%s139 + $0x2c] sm:$0xf]
      %v160 = vld [vmem:[%s139 + $0x30] sm:$0xf]
      %v161 = vld [vmem:[%s139 + $0x34] sm:$0xf]
      %v162 = vld [vmem:[%s139 + $0x38] sm:$0xf]
      %v163 = vld [vmem:[%s139 + $0x3c] sm:$0xf]
      %v164 = vld [vmem:[%s1] sm:$0xf]
      %v165 = vld [vmem:[%s1 + $0x4] sm:$0xf]
      %v182 = vunpack.c.l.b16 %v148
      %v183 = vunpack.c.l.b16 %v149
      %v184 = vunpack.c.l.b16 %v150
      %v185 = vunpack.c.l.b16 %v151
      %v186 = vunpack.c.l.b16 %v152
      %v187 = vunpack.c.l.b16 %v153
      %v188 = vunpack.c.l.b16 %v154
      %v189 = vunpack.c.l.b16 %v155
      %v190 = vunpack.c.l.b16 %v156
      %v191 = vunpack.c.l.b16 %v157
      %v192 = vunpack.c.l.b16 %v158
      %v193 = vunpack.c.l.b16 %v159
      %v194 = vunpack.c.l.b16 %v160
      %v195 = vunpack.c.l.b16 %v161
      %v196 = vunpack.c.l.b16 %v162
      %v197 = vunpack.c.l.b16 %v163
      %v198 = vpack.c.b16 %v183, %v182
      %v199 = vpack.c.b16 %v185, %v184
      %v200 = vpack.c.b16 %v187, %v186
      %v201 = vpack.c.b16 %v189, %v188
      %v202 = vpack.c.b16 %v191, %v190
      %v203 = vpack.c.b16 %v193, %v192
      %v204 = vpack.c.b16 %v195, %v194
      %v205 = vpack.c.b16 %v197, %v196
      %v208 = vunpack.c.l.b16 %v164
      %v209 = vunpack.c.l.b16 %v165
      %v210 = vpack.c.b16 %v209, %v208
      %vm212 = vcmask 130048
      %v214 = vsel %vm212, %v198, 0
      %v217 = vsel %vm212, %v199, 0
      %v220 = vsel %vm212, %v200, 0
      %v223 = vsel %vm212, %v201, 0
      %v226 = vsel %vm212, %v202, 0
      %v229 = vsel %vm212, %v203, 0
      %v232 = vsel %vm212, %v204, 0
      %v235 = vsel %vm212, %v205, 0
      %237 = vmatprep.subr.bf16.mxu0 0
      %238 = vmatpush1.bf16.msra.mxu0 %v210
      %239 = vmatprep.subr.bf16.mxu0 0
      %240 = vmatpush1.bf16.msra.mxu0 0
      %241 = vmatprep.subr.bf16.mxu0 0
      %242 = vmatpush1.bf16.msra.mxu0 0
      %243 = vmatprep.subr.bf16.mxu0 0
      %244 = vmatpush1.bf16.msra.mxu0 0
      %245 = vmatprep.subr.bf16.mxu0 0
      %246 = vmatpush1.bf16.msra.mxu0 0
      %247 = vmatprep.subr.bf16.mxu0 0
      %248 = vmatpush1.bf16.msra.mxu0 0
      %249 = vmatprep.subr.bf16.mxu0 0
      %250 = vmatpush1.bf16.msra.mxu0 0
      %251 = vmatprep.subr.bf16.mxu0 0
      %252 = vmatpush1.bf16.msra.mxu0 0
      %253 = vmatprep.subr.bf16.mxu0 0
      %254 = vmatpush1.bf16.msra.mxu0 0
      %255 = vmatprep.subr.bf16.mxu0 0
      %256 = vmatpush1.bf16.msra.mxu0 0
      %257 = vmatprep.subr.bf16.mxu0 0
      %258 = vmatpush1.bf16.msra.mxu0 0
      %259 = vmatprep.subr.bf16.mxu0 0
      %260 = vmatpush1.bf16.msra.mxu0 0
      %261 = vmatprep.subr.bf16.mxu0 0
      %262 = vmatpush1.bf16.msra.mxu0 0
      %263 = vmatprep.subr.bf16.mxu0 0
      %264 = vmatpush1.bf16.msra.mxu0 0
      %265 = vmatprep.subr.bf16.mxu0 0
      %266 = vmatpush1.bf16.msra.mxu0 0
      %267 = vmatprep.subr.bf16.mxu0 0
      %268 = vmatpush1.bf16.msra.mxu0 0
      %269 = vmatprep.mubr.bf16.mxu0 0
      %270 = vmatmul.mubr.bf16.gmra.mrb[0].mxu0 %v214
      %v271 = vpop.f32.mrb[0].mxu0
      %v272 = vadd.f32 0.0, %v271
      %v273 = vpop.f32.mrb[0].mxu0
      %v274 = vpop.f32.mrb[0].mxu0
      %v275 = vadd.f32 0.0, %v274
      %v276 = vpop.f32.mrb[0].mxu0
      %277 = vmatprep.mubr.bf16.mxu0 0
      %278 = vmatmul.mubr.bf16.gmra.mrb[0].mxu0 %v217
      %v279 = vpop.f32.mrb[0].mxu0
      %v280 = vadd.f32 0.0, %v279
      %v281 = vpop.f32.mrb[0].mxu0
      %v282 = vpop.f32.mrb[0].mxu0
      %v283 = vadd.f32 0.0, %v282
      %v284 = vpop.f32.mrb[0].mxu0
      %285 = vmatprep.mubr.bf16.mxu0 0
      %286 = vmatmul.mubr.bf16.gmra.mrb[0].mxu0 %v220
      %v287 = vpop.f32.mrb[0].mxu0
      %v288 = vadd.f32 0.0, %v287
      %v289 = vpop.f32.mrb[0].mxu0
      %v290 = vpop.f32.mrb[0].mxu0
      %v291 = vadd.f32 0.0, %v290
      %v292 = vpop.f32.mrb[0].mxu0
      %293 = vmatprep.mubr.bf16.mxu0 0
      %294 = vmatmul.mubr.bf16.gmra.mrb[0].mxu0 %v223
      %v295 = vpop.f32.mrb[0].mxu0
      %v296 = vadd.f32 0.0, %v295
      %v297 = vpop.f32.mrb[0].mxu0
      %v298 = vpop.f32.mrb[0].mxu0
      %v299 = vadd.f32 0.0, %v298
      %v300 = vpop.f32.mrb[0].mxu0
      %301 = vmatprep.mubr.bf16.mxu0 0
      %302 = vmatmul.mubr.bf16.gmra.mrb[0].mxu0 %v226
      %v303 = vpop.f32.mrb[0].mxu0
      %v304 = vadd.f32 0.0, %v303
      %v305 = vpop.f32.mrb[0].mxu0
      %v306 = vpop.f32.mrb[0].mxu0
      %v307 = vadd.f32 0.0, %v306
      %v308 = vpop.f32.mrb[0].mxu0
      %309 = vmatprep.mubr.bf16.mxu0 0
      %310 = vmatmul.mubr.bf16.gmra.mrb[0].mxu0 %v229
      %v311 = vpop.f32.mrb[0].mxu0
      %v312 = vadd.f32 0.0, %v311
      %v313 = vpop.f32.mrb[0].mxu0
      %v314 = vpop.f32.mrb[0].mxu0
      %v315 = vadd.f32 0.0, %v314
      %v316 = vpop.f32.mrb[0].mxu0
      %317 = vmatprep.mubr.bf16.mxu0 0
      %318 = vmatmul.mubr.bf16.gmra.mrb[0].mxu0 %v232
      %v319 = vpop.f32.mrb[0].mxu0
      %v320 = vadd.f32 0.0, %v319
      %v321 = vpop.f32.mrb[0].mxu0
      %v322 = vpop.f32.mrb[0].mxu0
      %v323 = vadd.f32 0.0, %v322
      %v324 = vpop.f32.mrb[0].mxu0
      %325 = vmatprep.mubr.bf16.mxu0 0
      %326 = vmatmul.mubr.bf16.gmra.mrb[0].mxu0 %v235
      %v327 = vpop.f32.mrb[0].mxu0
      %v328 = vadd.f32 0.0, %v327
      %v329 = vpop.f32.mrb[0].mxu0
      %v330 = vpop.f32.mrb[0].mxu0
      %v331 = vadd.f32 0.0, %v330
      %v332 = vpop.f32.mrb[0].mxu0
      %333 = vdwg.mxu0
      %v334 = vpack.c.bf16 %v275, %v272
      %v335 = vpack.c.bf16 %v283, %v280
      %v336 = vpack.c.bf16 %v291, %v288
      %v337 = vpack.c.bf16 %v299, %v296
      %v338 = vpack.c.bf16 %v307, %v304
      %v339 = vpack.c.bf16 %v315, %v312
      %v340 = vpack.c.bf16 %v323, %v320
      %v341 = vpack.c.bf16 %v331, %v328
      %v350 = vunpack.c.l.b16 %v334
      %v351 = vunpack.c.h.b16 %v334
      %v352 = vunpack.c.l.b16 %v335
      %v353 = vunpack.c.h.b16 %v335
      %v354 = vunpack.c.l.b16 %v336
      %v355 = vunpack.c.h.b16 %v336
      %v356 = vunpack.c.l.b16 %v337
      %v357 = vunpack.c.h.b16 %v337
      %v358 = vunpack.c.l.b16 %v338
      %v359 = vunpack.c.h.b16 %v338
      %v360 = vunpack.c.l.b16 %v339
      %v361 = vunpack.c.h.b16 %v339
      %v362 = vunpack.c.l.b16 %v340
      %v363 = vunpack.c.h.b16 %v340
      %v364 = vunpack.c.l.b16 %v341
      %v365 = vunpack.c.h.b16 %v341
      %v366 = vpack.c.b16 %v350, %v350
      %v367 = vpack.c.b16 %v351, %v351
      %v368 = vpack.c.b16 %v352, %v352
      %v369 = vpack.c.b16 %v353, %v353
      %v370 = vpack.c.b16 %v354, %v354
      %v371 = vpack.c.b16 %v355, %v355
      %v372 = vpack.c.b16 %v356, %v356
      %v373 = vpack.c.b16 %v357, %v357
      %v374 = vpack.c.b16 %v358, %v358
      %v375 = vpack.c.b16 %v359, %v359
      %v376 = vpack.c.b16 %v360, %v360
      %v377 = vpack.c.b16 %v361, %v361
      %v378 = vpack.c.b16 %v362, %v362
      %v379 = vpack.c.b16 %v363, %v363
      %v380 = vpack.c.b16 %v364, %v364
      %v381 = vpack.c.b16 %v365, %v365
      %vm398 = vcmask 257024
      %399 = vst.msk [vmem:[%s145] sm:$0xf] %vm398, %v366
      %400 = vst.msk [vmem:[%s145 + $0x4] sm:$0xf] %vm398, %v367
      %401 = vst.msk [vmem:[%s145 + $0x8] sm:$0xf] %vm398, %v368
      %402 = vst.msk [vmem:[%s145 + $0xc] sm:$0xf] %vm398, %v369
      %403 = vst.msk [vmem:[%s145 + $0x10] sm:$0xf] %vm398, %v370
      %404 = vst.msk [vmem:[%s145 + $0x14] sm:$0xf] %vm398, %v371
      %405 = vst.msk [vmem:[%s145 + $0x18] sm:$0xf] %vm398, %v372
      %406 = vst.msk [vmem:[%s145 + $0x1c] sm:$0xf] %vm398, %v373
      %407 = vst.msk [vmem:[%s145 + $0x20] sm:$0xf] %vm398, %v374
      %408 = vst.msk [vmem:[%s145 + $0x24] sm:$0xf] %vm398, %v375
      %409 = vst.msk [vmem:[%s145 + $0x28] sm:$0xf] %vm398, %v376
      %410 = vst.msk [vmem:[%s145 + $0x2c] sm:$0xf] %vm398, %v377
      %411 = vst.msk [vmem:[%s145 + $0x30] sm:$0xf] %vm398, %v378
      %412 = vst.msk [vmem:[%s145 + $0x34] sm:$0xf] %vm398, %v379
      %413 = vst.msk [vmem:[%s145 + $0x38] sm:$0xf] %vm398, %v380
      %414 = vst.msk [vmem:[%s145 + $0x3c] sm:$0xf] %vm398, %v381
      %s415 = smul.u32 16, %s13
      %p416 = scmp.lt.s32.totalorder %s415, 31
      %s417 = scalar_select %p416, %s415, 31
      %s418 = smul.addr %s417, 4
      %s419 = scalar_lea.vmem %s2, %s418
      // Predicated region
      $region29: #{tpu_custom_call.1} parent=27 // pred_check
        %p420 = pneg %p78
      $region30: #{tpu_custom_call.1} parent=27 // pred_check_branch
        %422 = sbr.rel (%p420) target = $region32
      $region31: #{tpu_custom_call.1} parent=27 // pred_region
        %s423 = smul.u32 16, %s13
      $region32: #{tpu_custom_call.1} parent=27 // pred_fallthru
        _
    $region28: #{tpu_custom_call.1} parent=5 // pred_fallthru
      _
    %p424 = scmp.le.s32.totalorder 2, %s8
    // Predicated region
    $region33: #{tpu_custom_call.1} parent=5 // pred_check
      %p425 = pneg %p424
    $region34: #{tpu_custom_call.1} parent=5 // pred_check_branch
      %427 = sbr.rel (%p425) target = $region36
    $region35: #{tpu_custom_call.1} parent=5 // pred_region
      %s428 = ssub.s32 %s8, 2
      // Predicated region
      $region37: #{tpu_custom_call.1} parent=35 // pred_check
        %p429 = pneg %p84
      $region38: #{tpu_custom_call.1} parent=35 // pred_check_branch
        %431 = sbr.rel (%p429) target = $region40
      $region39: #{tpu_custom_call.1} parent=35 // pred_region
        %s432 = smul.u32 16, %s14
        %p433 = scmp.lt.s32.totalorder %s432, 31
        %s434 = scalar_select %p433, %s432, 31
        %s435 = smul.addr %s434, 4
        %s436 = scalar_lea.vmem %s2, %s435
      $region40: #{tpu_custom_call.1} parent=35 // pred_fallthru
        _
    $region36: #{tpu_custom_call.1} parent=5 // pred_fallthru
      _
  $region6: #{tpu_custom_call.1} parent=0 // loop_footer
    %s12 = sadd.s32 1, %s8
  $region7: #{tpu_custom_call.1} parent=0 // loop_footer_branch
    %7 = sbr.rel target = $region3
  $region8: #{tpu_custom_call.1} parent=0 // loop_exit
    _

</llo_original>
